<compile_context>
chip_gen: v7x
topology: tpu7x:2x2x1
jax: 0.10.0
libtpu: 0.0.40
codegen_flags: <defaults>
</compile_context>

<pallas_src>
import functools

import jax
import jax.numpy as jnp
from jax.experimental import pallas as pl
from jax.experimental.pallas import tpu as pltpu

_LANES = 128
_MIN_TILE_ROWS = 32            # uint8 min sublane tile is (32, 128)
_MAX_TILE_ROWS = 8192          # (8192, 128) u8 tile = 1 MiB / block
_MIN_EXACT_TILE_ROWS = 1024    # don't accept pad-free tilings with tiny blocks
_VMEM_LIMIT_BYTES = 48 * 1024 * 1024


def _round_up(x, m):
    return -(-x // m) * m


def _choose_tiling(rows):
    """Pick (tile_rows, rows_padded).

    tile_rows is a multiple of 32 (u8 sublane tile), rows_padded a multiple of
    tile_rows.  Prefers a pad-free exact tiling; otherwise pads minimally while
    keeping >= 2 blocks (v7x megacore) when the image is big enough.
    """
    rows_aligned = _round_up(rows, _MIN_TILE_ROWS)
    # Tiny inputs: a single small block.
    if rows_aligned <= 2 * _MIN_TILE_ROWS:
        return rows_aligned, rows_aligned
    # Pad-free exact tiling for sublane-aligned row counts (common NHWC shapes).
    if rows % _MIN_TILE_ROWS == 0:
        upper = min(_MAX_TILE_ROWS, (rows // 2 // _MIN_TILE_ROWS) * _MIN_TILE_ROWS)
        floor_t = max(_MIN_TILE_ROWS, min(_MIN_EXACT_TILE_ROWS, upper))
        t = upper
        while t >= floor_t:
            if rows % t == 0:
                return t, rows
            t -= _MIN_TILE_ROWS
    # Padded fallback: exactly 2 blocks if that fits, else max-size tiles.
    if rows_aligned <= 2 * _MAX_TILE_ROWS:
        rows_padded = _round_up(rows, 2 * _MIN_TILE_ROWS)
        return rows_padded // 2, rows_padded
    return _MAX_TILE_ROWS, _round_up(rows, _MAX_TILE_ROWS)


def _quant_roundtrip(x_u8, qstep):
    """Quantize/dequantize one uint8 pixel tile; return (levels_f32, recon_u8)."""
    x = x_u8.astype(jnp.float32)
    levels = jnp.round(x * (1.0 / qstep))            # quantized symbols (>= 0)
    # x >= 0  =>  levels * qstep >= 0, so only the upper clamp is live.
    recon_u8 = jnp.minimum(jnp.round(levels * qstep), 255.0).astype(jnp.uint8)
    return levels, recon_u8


def _bpg_kernel(x_ref, recon_ref, *, qstep):
    """Reconstruction only (returns_file_size=False): pure u8 -> u8 sweep."""
    _, recon_u8 = _quant_roundtrip(x_ref[...], qstep)
    recon_ref[...] = recon_u8


def _bpg_kernel_with_size(x_ref, recon_ref, size_ref, *, qstep):
    """Reconstruction + per-block estimated compressed bit count (int32)."""
    levels, recon_u8 = _quant_roundtrip(x_ref[...], qstep)
    recon_ref[...] = recon_u8

    # Rate model: a nonzero symbol L > 0 costs ceil(log2(L+1)) + 1 bits, which
    # for integer L equals floor(log2(L)) + 2.  levels are exact nonnegative
    # integers in f32, so read floor(log2) straight from the IEEE-754 exponent
    # field: (bitcast(L, i32) >> 23) - 127 + 2 = (bits >> 23) - 125.
    exp_bits = (pltpu.bitcast(levels, jnp.int32) >> 23) - 125
    bits = jnp.where(levels > 0.0, exp_bits, 0)
    size_ref[0, 0] = jnp.sum(bits)                   # exact int32 partial sum


class BPGModulePallas:
    """Pallas surrogate of sc2bench's BPGModule (quantization round-trip)."""

    def __init__(self, color_mode='ycbcr', encoder='x265', subsampling_mode='444',
                 bit_depth='8', quality=50, returns_file_size=False):
        if color_mode not in ('ycbcr', 'rgb'):
            raise ValueError(f'Invalid color mode value: `{color_mode}`')
        if encoder not in ('x265', 'jctvc'):
            raise ValueError(f'Invalid encoder value: `{encoder}`')
        if str(subsampling_mode) not in ('420', '444'):
            raise ValueError(f'Invalid subsampling mode value: `{subsampling_mode}`')
        if str(bit_depth) not in ('8', '10'):
            raise ValueError(f'Invalid bit depth value: `{bit_depth}`')
        if not 0 <= quality <= 51:
            raise ValueError(f'Invalid quality value: `{quality}`')
        self.quality = int(quality)
        self.returns_file_size = returns_file_size
        # HEVC-style quantization step derived from the quality/QP value.
        self.qstep = float(2.0 ** ((self.quality - 4.0) / 6.0))

    def __call__(self, img_u8):
        # img_u8: (B, H, W, C) uint8, NHWC
        b, h, w, c = img_u8.shape
        n = b * h * w * c

        rows = -(-n // _LANES)
        tile_rows, rows_padded = _choose_tiling(rows)
        num_blocks = rows_padded // tile_rows
        pad = rows_padded * _LANES - n

        # Only pad (one extra HBM pass) when the flat u8 stream doesn't tile
        # exactly; typical lane/sublane-divisible shapes hit the pad-free path
        # where reshape is a free bitcast.
        flat = img_u8.reshape(-1)
        if pad:
            flat = jnp.pad(flat, (0, pad))
        x2d = flat.reshape(rows_padded, _LANES)

        grid = (num_blocks,)
        in_specs = [pl.BlockSpec((tile_rows, _LANES), lambda i: (i, 0))]
        recon_spec = pl.BlockSpec((tile_rows, _LANES), lambda i: (i, 0))
        cparams = pltpu.CompilerParams(
            dimension_semantics=("parallel",),
            vmem_limit_bytes=_VMEM_LIMIT_BYTES,
        )

        if self.returns_file_size:
            kernel = functools.partial(_bpg_kernel_with_size, qstep=self.qstep)
            recon2d, bit_partials = pl.pallas_call(
                kernel,
                out_shape=(
                    jax.ShapeDtypeStruct((rows_padded, _LANES), jnp.uint8),
                    jax.ShapeDtypeStruct((num_blocks, 1), jnp.int32),
                ),
                grid=grid,
                in_specs=in_specs,
                out_specs=(
                    recon_spec,
                    pl.BlockSpec((1, 1), lambda i: (i, 0),
                                 memory_space=pltpu.MemorySpace.SMEM),
                ),
                compiler_params=cparams,
            )(x2d)
            if pad:
                recon = recon2d.reshape(-1)[:n].reshape(b, h, w, c)
            else:
                recon = recon2d.reshape(b, h, w, c)
            total_bits = jnp.sum(bit_partials)            # int32-exact partials
            file_size_byte = ((total_bits + 7) // 8).astype(jnp.int32)
            return recon, file_size_byte

        kernel = functools.partial(_bpg_kernel, qstep=self.qstep)
        recon2d = pl.pallas_call(
            kernel,
            out_shape=jax.ShapeDtypeStruct((rows_padded, _LANES), jnp.uint8),
            grid=grid,
            in_specs=in_specs,
            out_specs=recon_spec,
            compiler_params=cparams,
        )(x2d)
        if pad:
            return recon2d.reshape(-1)[:n].reshape(b, h, w, c)
        return recon2d.reshape(b, h, w, c)


if __name__ == "__main__":
    key = jax.random.PRNGKey(0)
    # Small batch of synthetic RGB images, NHWC uint8 (B=2, H=16, W=16, C=3).
    img = jax.random.randint(key, (2, 16, 16, 3), 0, 256, dtype=jnp.int32)
    img = img.astype(jnp.uint8)

    # Path with file-size estimate.
    module = BPGModulePallas(quality=30, returns_file_size=True)
    recon, file_size = module(img)
    recon = jax.block_until_ready(recon)
    file_size = jax.block_until_ready(file_size)
    assert recon.shape == img.shape and recon.dtype == jnp.uint8
    assert int(file_size) >= 0

    # Reconstruction-only path (no rate-model compute, no size output).
    module_img_only = BPGModulePallas(quality=30, returns_file_size=False)
    recon_only = jax.block_until_ready(module_img_only(img))
    assert recon_only.shape == img.shape and recon_only.dtype == jnp.uint8
    assert bool(jnp.array_equal(recon_only, recon))

    print("KERNEL_OK")
</pallas_src>

<mosaic_0001>
module attributes {stable_mosaic.version = 11 : i64} {
  func.func @_bpg_kernel_with_size(%arg0: i32, %arg1: memref<32x128xi8, #tpu.memory_space<vmem>>, %arg2: memref<32x128xi8, #tpu.memory_space<vmem>>, %arg3: memref<1x1xi32, #tpu.memory_space<smem>>) attributes {dimension_semantics = [#tpu.dimension_semantics<parallel>], iteration_bounds = array<i64: 1>, scalar_prefetch = 0 : i64, scratch_operands = 0 : i64, tpu.core_type = #tpu.core_type<tc>, window_params = [{transform_indices = @transform_0, window_bounds = array<i64: 32, 128>}, {transform_indices = @transform_1, window_bounds = array<i64: 32, 128>}, {transform_indices = @transform_2, window_bounds = array<i64: 1, 1>}]} {
    %c0 = arith.constant 0 : index
    %c0_0 = arith.constant 0 : index
    %0 = vector.load %arg1[%c0, %c0_0] : memref<32x128xi8, #tpu.memory_space<vmem>>, vector<32x128xi8>
    %1 = arith.uitofp %0 : vector<32x128xi8> to vector<32x128xf32>
    %cst = arith.constant 0.0496062823 : f32
    %2 = vector.broadcast %cst : f32 to vector<32x128xf32>
    %3 = arith.mulf %1, %2 : vector<32x128xf32>
    %4 = math.roundeven %3 : vector<32x128xf32>
    %cst_1 = arith.constant 20.1587372 : f32
    %5 = vector.broadcast %cst_1 : f32 to vector<32x128xf32>
    %6 = arith.mulf %4, %5 : vector<32x128xf32>
    %7 = math.roundeven %6 : vector<32x128xf32>
    %cst_2 = arith.constant 2.550000e+02 : f32
    %8 = vector.broadcast %cst_2 : f32 to vector<32x128xf32>
    %9 = arith.minimumf %7, %8 : vector<32x128xf32>
    %10 = arith.fptoui %9 : vector<32x128xf32> to vector<32x128xi8>
    %c0_3 = arith.constant 0 : index
    %c0_4 = arith.constant 0 : index
    %11 = vector.load %arg2[%c0_3, %c0_4] : memref<32x128xi8, #tpu.memory_space<vmem>>, vector<32x128xi8>
    tpu.vector_store %arg2[%c0_3, %c0_4], %10 {strides = array<i32>} : memref<32x128xi8, #tpu.memory_space<vmem>>, vector<32x128xi8>,
    %12 = tpu.bitcast %4 : vector<32x128xf32> -> vector<32x128xi32>
    %c23_i32 = arith.constant 23 : i32
    %13 = vector.broadcast %c23_i32 : i32 to vector<32x128xi32>
    %14 = arith.shrsi %12, %13 : vector<32x128xi32>
    %c125_i32 = arith.constant 125 : i32
    %15 = vector.broadcast %c125_i32 : i32 to vector<32x128xi32>
    %16 = arith.subi %14, %15 : vector<32x128xi32>
    %cst_5 = arith.constant 0.000000e+00 : f32
    %17 = vector.broadcast %cst_5 : f32 to vector<32x128xf32>
    %18 = arith.cmpf ogt, %4, %17 : vector<32x128xf32>
    %c0_i32 = arith.constant 0 : i32
    %19 = vector.broadcast %c0_i32 : i32 to vector<32x128xi32>
    %20 = arith.select %18, %16, %19 : vector<32x128xi1>, vector<32x128xi32>
    %21 = vector.shape_cast %20 : vector<32x128xi32> to vector<1x32x128xi32>
    %cst_6 = arith.constant dense<0> : vector<1xi32>
    %22 = vector.multi_reduction <add>, %21, %cst_6 [1, 2] : vector<1x32x128xi32> to vector<1xi32>
    %23 = vector.shape_cast %22 : vector<1xi32> to vector<1x1x1xi32>
    %24 = vector.extract %23[0, 0, 0] : i32 from vector<1x1x1xi32>
    %c0_7 = arith.constant 0 : index
    %c0_8 = arith.constant 0 : index
    %25 = memref.load %arg3[%c0_7, %c0_8] : memref<1x1xi32, #tpu.memory_space<smem>>
    memref.store %24, %arg3[%c0_7, %c0_8] : memref<1x1xi32, #tpu.memory_space<smem>>
    return
  }
  func.func @transform_0(%arg0: i32) -> (i32, i32) {
    %c0_i32 = arith.constant 0 : i32
    %c0_i32_0 = arith.constant 0 : i32
    return %arg0, %c0_i32 : i32, i32
  }
  func.func @transform_1(%arg0: i32) -> (i32, i32) {
    %c0_i32 = arith.constant 0 : i32
    %c0_i32_0 = arith.constant 0 : i32
    return %arg0, %c0_i32 : i32, i32
  }
  func.func @transform_2(%arg0: i32) -> (i32, i32) {
    %c0_i32 = arith.constant 0 : i32
    %c0_i32_0 = arith.constant 0 : i32
    return %arg0, %c0_i32 : i32, i32
  }
}

</mosaic_0001>

<llo_original>
// kernel: tpu_custom_call.1
$region0: #{tpu_custom_call.1}
  #allocation0 [shape = 'u32[]', space=smem, size = 0x4, offset = 0x4, fixed_abs, tag = 'smem constant byte address 0x4 - core index']
  #allocation1 [shape = 'u32[144,128]{1,0:T(1,128)}', space=vmem, size = 0x12000, scoped, tag = 'internal scratch']
  %s0 = inlined_call_operand.hbm [shape: u8[32,128], index: 0, kind: input, shape index: {}]
  %s1 = inlined_call_operand.hbm [shape: u8[32,128], index: 1, kind: output, shape index: {0}]
  %s2 = inlined_call_operand.hbm [shape: s32[1,1], index: 2, kind: output, shape index: {1}]
  %3 = xla_tuple %s1, %s2
  %s4 = sld [smem:[#allocation0]]
  $region26: #{tpu_custom_call.1} parent=0
    _
  %s6 = ssub.s32 1, %s4
  %s7 = scalar_select 0, %s6, %s4
  $region1: #{tpu_custom_call.1} parent=0
    #allocation2 [shape = 'u8[4096]{0}', space=vmem, size = 0x1000, scoped, tag = 'input window, operand 0, single buffered']
    #allocation3 [shape = 's32[1]{0}', space=sflag, size = 0x4, scoped, tag = 'scoped memory for tpu_custom_call.1']
    #allocation4 [shape = 's32[1]{0}', space=sflag, size = 0x4, scoped, tag = 'scoped memory for tpu_custom_call.1']
    #allocation5 [shape = 's32[1]{0}', space=sflag, size = 0x4, scoped, tag = 'scoped memory for tpu_custom_call.1']
    #allocation6 [shape = 'u8[4096]{0}', space=vmem, size = 0x1000, scoped, tag = 'output window, operand 0, single buffered']
    #allocation7 [shape = 'u8[512]{0}', space=smem, size = 0x200, scoped, tag = 'output window, operand 1, single buffered']
    %8 = vsyncpa [#allocation3], 0
    %9 = vsyncpa [#allocation4], 0
    %10 = vsyncpa [#allocation5], 0
    // Predicated region
    $region2: #{tpu_custom_call.1} parent=1 // pred_check
      _
    $region3: #{tpu_custom_call.1} parent=1 // pred_check_branch
      %12 = sbr.rel (0) target = $region5
    $region4: #{tpu_custom_call.1} parent=1 // pred_region
      %s14 = ssub.s32 128, 128
      %15 = vsyncadd [#allocation3], %s14
      %s17 = sshll.u32 [#allocation2], 4
      %s18 = int_to_ptr.vmem [resolvable:$true] %s17
      %20 = dma.hbm_to_vmem [thread:$0]  %s0, 128, %s18, [#allocation3]
    $region5: #{tpu_custom_call.1} parent=1 // pred_fallthru
      _
    // Predicated region
    $region6: #{tpu_custom_call.1} parent=1 // pred_check
      _
    $region7: #{tpu_custom_call.1} parent=1 // pred_check_branch
      %22 = sbr.rel (0) target = $region9
    $region8: #{tpu_custom_call.1} parent=1 // pred_region
      %23 = dma.done [#allocation3], 128
    $region9: #{tpu_custom_call.1} parent=1 // pred_fallthru
      _
    %v24 = vld [vmem:[#allocation2] sm:$0xff]
    %v25 = vunpack.c.0.s8 %v24
    %v26 = vunpack.c.1.s8 %v24
    %v27 = vunpack.c.2.s8 %v24
    %v28 = vunpack.c.3.s8 %v24
    %v29 = vand.u32 %v25, 255
    %v30 = vand.u32 %v26, 255
    %v31 = vand.u32 %v27, 255
    %v32 = vand.u32 %v28, 255
    %v33 = vcvt.s32.f32 %v29
    %v34 = vcvt.s32.f32 %v30
    %v35 = vcvt.s32.f32 %v31
    %v36 = vcvt.s32.f32 %v32
    %v37 = vmul.f32 %v33, 0.049606282
    %v38 = vmul.f32 %v34, 0.049606282
    %v39 = vmul.f32 %v35, 0.049606282
    %v40 = vmul.f32 %v36, 0.049606282
    %v41 = vround.ne.pseudo %v37
    %v42 = vround.ne.pseudo %v38
    %v43 = vround.ne.pseudo %v39
    %v44 = vround.ne.pseudo %v40
    %v45 = vmul.f32 %v41, 20.158737
    %v46 = vmul.f32 %v42, 20.158737
    %v47 = vmul.f32 %v43, 20.158737
    %v48 = vmul.f32 %v44, 20.158737
    %v49 = vround.ne.pseudo %v45
    %v50 = vround.ne.pseudo %v46
    %v51 = vround.ne.pseudo %v47
    %v52 = vround.ne.pseudo %v48
    %v53 = vmin.f32 %v49, 255.0
    %v54 = vmin.f32 %v50, 255.0
    %v55 = vmin.f32 %v51, 255.0
    %v56 = vmin.f32 %v52, 255.0
    %v57 = vtrunc.f32 %v53
    %v58 = vtrunc.f32 %v54
    %v59 = vtrunc.f32 %v55
    %v60 = vtrunc.f32 %v56
    %v61 = vpack.c.f32.eXmY %v57, %v58, 56
    %v65 = vpack.c.f32.eXmY %v59, %v60, 56
    %v69 = vpack.c.b8 %v65, %v61
    %71 = vst [vmem:[#allocation6] sm:$0xff] %v69
    %v76 = vshra.s32 %v41, 23
    %v77 = vshra.s32 %v42, 23
    %v78 = vshra.s32 %v43, 23
    %v79 = vshra.s32 %v44, 23
    %v80 = vsub.s32 %v76, 125
    %v81 = vsub.s32 %v77, 125
    %v82 = vsub.s32 %v78, 125
    %v83 = vsub.s32 %v79, 125
    %vm84 = vcmp.gt.f32.partialorder %v41, 0.0
    %vm85 = vcmp.gt.f32.partialorder %v42, 0.0
    %vm86 = vcmp.gt.f32.partialorder %v43, 0.0
    %vm87 = vcmp.gt.f32.partialorder %v44, 0.0
    %v88 = vsel %vm84, %v80, 0
    %v89 = vsel %vm85, %v81, 0
    %v90 = vsel %vm86, %v82, 0
    %v91 = vsel %vm87, %v83, 0
    %v92 = vadd.s32 %v88, %v89
    %v93 = vadd.s32 %v90, %v91
    %v94 = vadd.s32 %v92, %v93
    %v95 = vand.u32 %v94, 65535
    %v96 = vshrl.u32 %v94, 16
    %v97 = vcvt.s32.f32 %v95
    %v98 = vcvt.s32.f32 %v96
    %99 = vadd.xlane.f32.xlu0 %v97
    %v100 = vpop.xlane.xlu0 %99
    %101 = vadd.xlane.f32.xlu0 %v98
    %v102 = vpop.xlane.xlu0 %101
    %v103 = vcvt.f32.s32 %v100
    %v104 = vcvt.f32.s32 %v102
    %v105 = vshll.u32 %v104, 16
    %v106 = vadd.s32 %v105, %v103
    %v107 = vrot.slane %v106, 4
    %v108 = vadd.s32 %v106, %v107
    %v109 = vrot.slane %v108, 2
    %v110 = vadd.s32 %v108, %v109
    %v111 = vrot.slane %v110, 1
    %v112 = vadd.s32 %v110, %v111
    %s113 = vtos %v112
    %s114 = scalar_lea.smem [#allocation7], 0
    %115 = sst [smem:[%s114]] %s113
    // Predicated region
    $region10: #{tpu_custom_call.1} parent=1 // pred_check
      _
    $region11: #{tpu_custom_call.1} parent=1 // pred_check_branch
      %117 = sbr.rel (0) target = $region13
    $region12: #{tpu_custom_call.1} parent=1 // pred_region
      %s119 = ssub.s32 128, 128
      %120 = vsyncadd [#allocation4], %s119
      %s122 = sshll.u32 [#allocation6], 4
      %s123 = int_to_ptr.vmem [resolvable:$true] %s122
      %125 = dma.vmem_to_hbm [thread:$0]  %s123, 128, %s1, [#allocation4]
    $region13: #{tpu_custom_call.1} parent=1 // pred_fallthru
      _
    // Predicated region
    $region14: #{tpu_custom_call.1} parent=1 // pred_check
      _
    $region15: #{tpu_custom_call.1} parent=1 // pred_check_branch
      %127 = sbr.rel (0) target = $region17
    $region16: #{tpu_custom_call.1} parent=1 // pred_region
      %s129 = ssub.s32 16, 16
      %130 = vsyncadd [#allocation5], %s129
      %133 = dma.smem_to_hbm [#allocation7], 16, %s2, [#allocation5]
    $region17: #{tpu_custom_call.1} parent=1 // pred_fallthru
      _
    // Predicated region
    $region18: #{tpu_custom_call.1} parent=1 // pred_check
      _
    $region19: #{tpu_custom_call.1} parent=1 // pred_check_branch
      %135 = sbr.rel (0) target = $region21
    $region20: #{tpu_custom_call.1} parent=1 // pred_region
      %136 = dma.done [#allocation4], 128
    $region21: #{tpu_custom_call.1} parent=1 // pred_fallthru
      _
    // Predicated region
    $region22: #{tpu_custom_call.1} parent=1 // pred_check
      _
    $region23: #{tpu_custom_call.1} parent=1 // pred_check_branch
      %138 = sbr.rel (0) target = $region25
    $region24: #{tpu_custom_call.1} parent=1 // pred_region
      %139 = dma.done [#allocation5], 16
    $region25: #{tpu_custom_call.1} parent=1 // pred_fallthru
      _
    %140 = sfence
    %141 = vsyncpa [#allocation3], 1
    %142 = vsyncpa [#allocation4], 1
    %143 = vsyncpa [#allocation5], 1

</llo_original>
